<compile_context>
chip_gen: v5e
topology: v5e:2x2
jax: 0.10.0
libtpu: 0.0.40
codegen_flags: <defaults>
</compile_context>

<pallas_src>
import functools

import jax
import jax.numpy as jnp
import numpy as np
from jax.experimental import pallas as pl
from jax.experimental.pallas import tpu as pltpu

HIDDEN = 128  # fixed by the module (feature width / LSTM hidden / noisy hidden)


def _round_up(n, m):
    return ((n + m - 1) // m) * m


def _choose_bt(B):
    """Batch rows per grid step.

    Big tiles amortize the ~0.35 us per-grid-step overhead; capped so the grid
    keeps >= 2 steps when B is large (so v7x's second TensorCore gets work) and
    stays a multiple of 8 (sublane alignment).  Full-array block for tiny B.
    """
    if B <= 8:
        return B
    desired = 512
    half = _round_up((B + 1) // 2, 8)          # ensures >= 2 grid steps
    return max(8, min(desired, _round_up(B, 8), half))


# ----------------------------------------------------------------------------- #
# Fused forward kernel
# ----------------------------------------------------------------------------- #
def _make_kernel(out_dim, atom_pad):
    adv_w = out_dim * atom_pad

    def kernel(x_ref, wf_ref, bf_ref, wih_ref, bg_ref,
               whid_ref, bhid_ref, whead_ref, bhead_ref, out_ref):
        bf16, f32 = jnp.bfloat16, jnp.float32

        # feature = ReLU(x @ W_feat + b_feat)   (x already bf16 from wrapper)
        feat = jnp.maximum(
            jnp.dot(x_ref[...], wf_ref[...],
                    preferred_element_type=f32) + bf_ref[...], 0.0)

        # LSTM, seq_len=1, h0=c0=0.  Forget gate pruned host-side:
        # gate layout is [i | g | o], each HIDDEN wide.
        gates = jnp.dot(feat.astype(bf16), wih_ref[...],
                        preferred_element_type=f32) + bg_ref[...]
        i_g = jax.nn.sigmoid(gates[:, 0 * HIDDEN:1 * HIDDEN])
        g_g = jnp.tanh(gates[:, 1 * HIDDEN:2 * HIDDEN])
        o_g = jax.nn.sigmoid(gates[:, 2 * HIDDEN:3 * HIDDEN])
        h = o_g * jnp.tanh(i_g * g_g)          # c = i*g  (f*c0 == 0)

        # fused noisy hidden layers: one (128, 256) matmul
        hid = jnp.maximum(
            jnp.dot(h.astype(bf16), whid_ref[...],
                    preferred_element_type=f32) + bhid_ref[...], 0.0)

        # fused block-diagonal adv|val output head: one K=256 MXU pass.
        # Padded atom lanes of the val block carry a -1e30 bias, so they fall
        # out of the softmax automatically (exp underflows to 0).
        heads = jnp.dot(hid.astype(bf16), whead_ref[...],
                        preferred_element_type=f32) + bhead_ref[...]
        adv = heads[:, :adv_w]                 # (bt, out_dim*atom_pad)
        val = heads[:, adv_w:]                 # (bt, atom_pad)

        # mean over actions (per atom lane) — aligned 128-lane block adds
        mean_adv = adv[:, 0:atom_pad]
        for a in range(1, out_dim):
            mean_adv = mean_adv + adv[:, a * atom_pad:(a + 1) * atom_pad]
        base = val - mean_adv * (1.0 / out_dim)   # hoisted out of action loop

        # dueling combine + softmax(atoms) + clamp, per action (static loop)
        for a in range(out_dim):
            q = base + adv[:, a * atom_pad:(a + 1) * atom_pad]
            m = jnp.max(q, axis=-1, keepdims=True)
            e = jnp.exp(q - m)
            s = jnp.sum(e, axis=-1, keepdims=True)
            p = e * pl.reciprocal(s, approx=True)
            out_ref[:, a * atom_pad:(a + 1) * atom_pad] = (
                jnp.maximum(p, 0.001).astype(out_ref.dtype))

    return kernel


def rainbow_forward(x, kp, out_dim, atom_size):
    B, in_dim = x.shape
    atom_pad = _round_up(atom_size, 128)
    out_w = out_dim * atom_pad

    bt = _choose_bt(B)
    nb = pl.cdiv(B, bt)

    kernel = _make_kernel(out_dim, atom_pad)

    args = [x.astype(jnp.bfloat16),            # halve x DMA; matmul inputs bf16
            kp["w_feat"], kp["b_feat"],
            kp["w_ih"], kp["b_gates"],
            kp["w_hid"], kp["b_hid"],
            kp["w_head"], kp["b_head"]]

    # x / out are tiled over batch; weights+biases get constant index maps so
    # they stay resident in VMEM across grid steps.
    in_specs = [pl.BlockSpec((bt, in_dim), lambda i: (i, 0))]
    in_specs += [pl.BlockSpec(a.shape, lambda i: (0, 0)) for a in args[1:]]
    out_spec = pl.BlockSpec((bt, out_w), lambda i: (i, 0))

    dist_pad = pl.pallas_call(
        kernel,
        out_shape=jax.ShapeDtypeStruct((B, out_w), jnp.bfloat16),
        grid=(nb,),
        in_specs=in_specs,
        out_specs=out_spec,
        compiler_params=pltpu.CompilerParams(
            dimension_semantics=("parallel",)),
    )(*args)

    # strip atom padding + 3-D view + restore f32 (free layout plumbing)
    return dist_pad.reshape(B, out_dim, atom_pad)[:, :, :atom_size].astype(
        jnp.float32)


# ----------------------------------------------------------------------------- #
# Parameter construction (logical, PyTorch-style) + packing + pure-JAX reference
# ----------------------------------------------------------------------------- #
def make_params(key, in_dim, out_dim, atom_size):
    """Logical parameters: weights (fan_in, fan_out) bf16, biases (1, fan_out) f32."""
    ks = jax.random.split(key, 7)

    def lin(k, fan_in, fan_out):
        kw, kb = jax.random.split(k)
        bound = 1.0 / np.sqrt(fan_in)
        w = jax.random.uniform(kw, (fan_in, fan_out), jnp.float32, -bound, bound)
        b = jax.random.uniform(kb, (1, fan_out), jnp.float32, -bound, bound)
        return w.astype(jnp.bfloat16), b

    w_feat, b_feat = lin(ks[0], in_dim, HIDDEN)
    # LSTM: stored as W_ih^T (HIDDEN, 4*HIDDEN), gate order [i|f|g|o].
    # weight_hh_l0 is irrelevant for this forward (h0 = 0).
    w_ih, b_ih = lin(ks[1], HIDDEN, 4 * HIDDEN)
    _, b_hh = lin(ks[2], HIDDEN, 4 * HIDDEN)
    # NoisyLinear layers with noise folded into effective weights.
    w_advh, b_advh = lin(ks[3], HIDDEN, HIDDEN)
    w_valh, b_valh = lin(ks[4], HIDDEN, HIDDEN)
    w_adv, b_adv = lin(ks[5], HIDDEN, out_dim * atom_size)
    w_val, b_val = lin(ks[6], HIDDEN, atom_size)

    return dict(w_feat=w_feat, b_feat=b_feat,
                w_ih=w_ih, b_ih=b_ih, b_hh=b_hh,
                w_advh=w_advh, b_advh=b_advh, w_valh=w_valh, b_valh=b_valh,
                w_adv=w_adv, b_adv=b_adv, w_val=w_val, b_val=b_val)


def pack_params(p, out_dim, atom_size):
    """Kernel layout: prune forget gate, fuse hidden layers, fuse + pad heads."""
    H = HIDDEN
    atom_pad = _round_up(atom_size, 128)
    adv_w = out_dim * atom_pad

    # LSTM: keep [i | g | o] gate columns only; fold b_ih + b_hh.
    w_ih = p["w_ih"]
    w_ih_k = jnp.concatenate(
        [w_ih[:, 0:H], w_ih[:, 2 * H:3 * H], w_ih[:, 3 * H:4 * H]], axis=1)
    b_sum = p["b_ih"] + p["b_hh"]
    b_gates = jnp.concatenate(
        [b_sum[:, 0:H], b_sum[:, 2 * H:3 * H], b_sum[:, 3 * H:4 * H]], axis=1)

    # fused hidden layers (adv | val), one 256-wide RHS.
    w_hid = jnp.concatenate([p["w_advh"], p["w_valh"]], axis=1)
    b_hid = jnp.concatenate([p["b_advh"], p["b_valh"]], axis=1)

    # fused block-diagonal output head [[w_adv, 0], [0, w_val]]:
    #   columns [0, adv_w)          -> advantage, action a owns lanes
    #                                  [a*atom_pad, a*atom_pad+atom_size)
    #   columns [adv_w, adv_w+128)  -> value
    # (Note: on v5e the 128-deep MXU pays one extra pass for the zero blocks.)
    w_head = jnp.zeros((2 * H, adv_w + atom_pad), jnp.bfloat16)
    b_head = jnp.zeros((1, adv_w + atom_pad), jnp.float32)
    for a in range(out_dim):
        w_head = w_head.at[:H, a * atom_pad:a * atom_pad + atom_size].set(
            p["w_adv"][:, a * atom_size:(a + 1) * atom_size])
        b_head = b_head.at[:, a * atom_pad:a * atom_pad + atom_size].set(
            p["b_adv"][:, a * atom_size:(a + 1) * atom_size])
    w_head = w_head.at[H:, adv_w:adv_w + atom_size].set(p["w_val"])
    b_head = b_head.at[:, adv_w:adv_w + atom_size].set(p["b_val"])
    # bake the padded-atom mask into the value bias: padded lanes get
    # q = -1e30 + 0 - 0, exp underflows to 0 -> no in-kernel masking needed.
    if atom_pad > atom_size:
        b_head = b_head.at[:, adv_w + atom_size:].set(-1e30)

    return dict(w_feat=p["w_feat"], b_feat=p["b_feat"],
                w_ih=w_ih_k, b_gates=b_gates,
                w_hid=w_hid, b_hid=b_hid,
                w_head=w_head, b_head=b_head)


def reference_forward(x, p, out_dim, atom_size):
    """Pure-JAX f32 reference (module semantics), using the same bf16-stored weights."""
    H = HIDDEN
    B = x.shape[0]
    w = lambda a: a.astype(jnp.float32)

    feat = jax.nn.relu(x @ w(p["w_feat"]) + p["b_feat"])
    gates = feat @ w(p["w_ih"]) + p["b_ih"] + p["b_hh"]
    i_g = jax.nn.sigmoid(gates[:, 0 * H:1 * H])
    f_g = jax.nn.sigmoid(gates[:, 1 * H:2 * H])
    g_g = jnp.tanh(gates[:, 2 * H:3 * H])
    o_g = jax.nn.sigmoid(gates[:, 3 * H:4 * H])
    c = f_g * 0.0 + i_g * g_g                 # c0 = 0
    h = o_g * jnp.tanh(c)

    adv_hid = jax.nn.relu(h @ w(p["w_advh"]) + p["b_advh"])
    val_hid = jax.nn.relu(h @ w(p["w_valh"]) + p["b_valh"])
    adv = (adv_hid @ w(p["w_adv"]) + p["b_adv"]).reshape(B, out_dim, atom_size)
    val = (val_hid @ w(p["w_val"]) + p["b_val"]).reshape(B, 1, atom_size)
    q = val + adv - adv.mean(axis=1, keepdims=True)
    return jnp.maximum(jax.nn.softmax(q, axis=-1), 0.001)


if __name__ == "__main__":
    B, IN_DIM, OUT_DIM, ATOM_SIZE = 2, 32, 4, 51

    key = jax.random.PRNGKey(0)
    kx, kp = jax.random.split(key)
    x = jax.random.normal(kx, (B, IN_DIM), jnp.float32)

    logical = make_params(kp, IN_DIM, OUT_DIM, ATOM_SIZE)
    packed = pack_params(logical, OUT_DIM, ATOM_SIZE)

    fwd = jax.jit(functools.partial(rainbow_forward, kp=packed,
                                    out_dim=OUT_DIM, atom_size=ATOM_SIZE))
    dist = jax.block_until_ready(fwd(x))

    ref = reference_forward(x, logical, OUT_DIM, ATOM_SIZE)
    assert dist.shape == (B, OUT_DIM, ATOM_SIZE)
    # Tolerance covers bf16 matmul inputs, bf16 output store, approx reciprocal.
    np.testing.assert_allclose(np.asarray(dist), np.asarray(ref),
                               rtol=2e-2, atol=1e-3)
    print("KERNEL_OK")
</pallas_src>

<mosaic_0001>
module attributes {stable_mosaic.version = 11 : i64} {
  func.func @kernel(%arg0: i32, %arg1: memref<2x32xbf16, #tpu.memory_space<vmem>>, %arg2: memref<32x128xbf16, #tpu.memory_space<vmem>>, %arg3: memref<1x128xf32, #tpu.memory_space<vmem>>, %arg4: memref<128x384xbf16, #tpu.memory_space<vmem>>, %arg5: memref<1x384xf32, #tpu.memory_space<vmem>>, %arg6: memref<128x256xbf16, #tpu.memory_space<vmem>>, %arg7: memref<1x256xf32, #tpu.memory_space<vmem>>, %arg8: memref<256x640xbf16, #tpu.memory_space<vmem>>, %arg9: memref<1x640xf32, #tpu.memory_space<vmem>>, %arg10: memref<2x512xbf16, #tpu.memory_space<vmem>>) attributes {dimension_semantics = [#tpu.dimension_semantics<parallel>], iteration_bounds = array<i64: 1>, scalar_prefetch = 0 : i64, scratch_operands = 0 : i64, tpu.core_type = #tpu.core_type<tc>, window_params = [{transform_indices = @transform_0, window_bounds = array<i64: 2, 32>}, {pipeline_mode = #tpu.pipeline_mode<synchronous>, transform_indices = @transform_1, window_bounds = array<i64: 32, 128>}, {pipeline_mode = #tpu.pipeline_mode<synchronous>, transform_indices = @transform_2, window_bounds = array<i64: 1, 128>}, {pipeline_mode = #tpu.pipeline_mode<synchronous>, transform_indices = @transform_3, window_bounds = array<i64: 128, 384>}, {pipeline_mode = #tpu.pipeline_mode<synchronous>, transform_indices = @transform_4, window_bounds = array<i64: 1, 384>}, {pipeline_mode = #tpu.pipeline_mode<synchronous>, transform_indices = @transform_5, window_bounds = array<i64: 128, 256>}, {pipeline_mode = #tpu.pipeline_mode<synchronous>, transform_indices = @transform_6, window_bounds = array<i64: 1, 256>}, {pipeline_mode = #tpu.pipeline_mode<synchronous>, transform_indices = @transform_7, window_bounds = array<i64: 256, 640>}, {pipeline_mode = #tpu.pipeline_mode<synchronous>, transform_indices = @transform_8, window_bounds = array<i64: 1, 640>}, {transform_indices = @transform_9, window_bounds = array<i64: 2, 512>}]} {
    %c0 = arith.constant 0 : index
    %c0_0 = arith.constant 0 : index
    %0 = vector.load %arg1[%c0, %c0_0] : memref<2x32xbf16, #tpu.memory_space<vmem>>, vector<2x32xbf16>
    %c0_1 = arith.constant 0 : index
    %c0_2 = arith.constant 0 : index
    %1 = vector.load %arg2[%c0_1, %c0_2] : memref<32x128xbf16, #tpu.memory_space<vmem>>, vector<32x128xbf16>
    %cst = arith.constant dense<0.000000e+00> : vector<2x128xf32>
    %2 = tpu.matmul %0, %1, %cst {dimension_numbers = #tpu.dot_dimension_numbers<[1], [0], [0], [1], [0, 0, 1, 1], [], []>} : vector<2x32xbf16>, vector<32x128xbf16>, vector<2x128xf32> -> vector<2x128xf32>
    %c0_3 = arith.constant 0 : index
    %c0_4 = arith.constant 0 : index
    %3 = vector.load %arg3[%c0_3, %c0_4] : memref<1x128xf32, #tpu.memory_space<vmem>>, vector<1x128xf32>
    %4 = vector.broadcast %3 : vector<1x128xf32> to vector<2x128xf32>
    %5 = arith.addf %2, %4 : vector<2x128xf32>
    %cst_5 = arith.constant 0.000000e+00 : f32
    %6 = vector.broadcast %cst_5 : f32 to vector<2x128xf32>
    %7 = arith.maximumf %5, %6 : vector<2x128xf32>
    %8 = arith.truncf %7 : vector<2x128xf32> to vector<2x128xbf16>
    %c0_6 = arith.constant 0 : index
    %c0_7 = arith.constant 0 : index
    %9 = vector.load %arg4[%c0_6, %c0_7] : memref<128x384xbf16, #tpu.memory_space<vmem>>, vector<128x384xbf16>
    %cst_8 = arith.constant dense<0.000000e+00> : vector<2x384xf32>
    %10 = tpu.matmul %8, %9, %cst_8 {dimension_numbers = #tpu.dot_dimension_numbers<[1], [0], [0], [1], [0, 0, 1, 1], [], []>} : vector<2x128xbf16>, vector<128x384xbf16>, vector<2x384xf32> -> vector<2x384xf32>
    %c0_9 = arith.constant 0 : index
    %c0_10 = arith.constant 0 : index
    %11 = vector.load %arg5[%c0_9, %c0_10] : memref<1x384xf32, #tpu.memory_space<vmem>>, vector<1x384xf32>
    %12 = vector.broadcast %11 : vector<1x384xf32> to vector<2x384xf32>
    %13 = arith.addf %10, %12 : vector<2x384xf32>
    %14 = vector.extract_strided_slice %13 {offsets = [0, 0], sizes = [2, 128], strides = [1, 1]} : vector<2x384xf32> to vector<2x128xf32>
    %15 = arith.negf %14 : vector<2x128xf32>
    %16 = math.exp %15 : vector<2x128xf32>
    %cst_11 = arith.constant 1.000000e+00 : f32
    %17 = vector.broadcast %cst_11 : f32 to vector<2x128xf32>
    %18 = arith.addf %17, %16 : vector<2x128xf32>
    %19 = arith.divf %17, %18 : vector<2x128xf32>
    %20 = vector.extract_strided_slice %13 {offsets = [0, 128], sizes = [2, 128], strides = [1, 1]} : vector<2x384xf32> to vector<2x128xf32>
    %21 = math.tanh %20 : vector<2x128xf32>
    %22 = vector.extract_strided_slice %13 {offsets = [0, 256], sizes = [2, 128], strides = [1, 1]} : vector<2x384xf32> to vector<2x128xf32>
    %23 = arith.negf %22 : vector<2x128xf32>
    %24 = math.exp %23 : vector<2x128xf32>
    %cst_12 = arith.constant 1.000000e+00 : f32
    %25 = vector.broadcast %cst_12 : f32 to vector<2x128xf32>
    %26 = arith.addf %25, %24 : vector<2x128xf32>
    %27 = arith.divf %25, %26 : vector<2x128xf32>
    %28 = arith.mulf %19, %21 : vector<2x128xf32>
    %29 = math.tanh %28 : vector<2x128xf32>
    %30 = arith.mulf %27, %29 : vector<2x128xf32>
    %31 = arith.truncf %30 : vector<2x128xf32> to vector<2x128xbf16>
    %c0_13 = arith.constant 0 : index
    %c0_14 = arith.constant 0 : index
    %32 = vector.load %arg6[%c0_13, %c0_14] : memref<128x256xbf16, #tpu.memory_space<vmem>>, vector<128x256xbf16>
    %cst_15 = arith.constant dense<0.000000e+00> : vector<2x256xf32>
    %33 = tpu.matmul %31, %32, %cst_15 {dimension_numbers = #tpu.dot_dimension_numbers<[1], [0], [0], [1], [0, 0, 1, 1], [], []>} : vector<2x128xbf16>, vector<128x256xbf16>, vector<2x256xf32> -> vector<2x256xf32>
    %c0_16 = arith.constant 0 : index
    %c0_17 = arith.constant 0 : index
    %34 = vector.load %arg7[%c0_16, %c0_17] : memref<1x256xf32, #tpu.memory_space<vmem>>, vector<1x256xf32>
    %35 = vector.broadcast %34 : vector<1x256xf32> to vector<2x256xf32>
    %36 = arith.addf %33, %35 : vector<2x256xf32>
    %cst_18 = arith.constant 0.000000e+00 : f32
    %37 = vector.broadcast %cst_18 : f32 to vector<2x256xf32>
    %38 = arith.maximumf %36, %37 : vector<2x256xf32>
    %39 = arith.truncf %38 : vector<2x256xf32> to vector<2x256xbf16>
    %c0_19 = arith.constant 0 : index
    %c0_20 = arith.constant 0 : index
    %40 = vector.load %arg8[%c0_19, %c0_20] : memref<256x640xbf16, #tpu.memory_space<vmem>>, vector<256x640xbf16>
    %cst_21 = arith.constant dense<0.000000e+00> : vector<2x640xf32>
    %41 = tpu.matmul %39, %40, %cst_21 {dimension_numbers = #tpu.dot_dimension_numbers<[1], [0], [0], [1], [0, 0, 1, 1], [], []>} : vector<2x256xbf16>, vector<256x640xbf16>, vector<2x640xf32> -> vector<2x640xf32>
    %c0_22 = arith.constant 0 : index
    %c0_23 = arith.constant 0 : index
    %42 = vector.load %arg9[%c0_22, %c0_23] : memref<1x640xf32, #tpu.memory_space<vmem>>, vector<1x640xf32>
    %43 = vector.broadcast %42 : vector<1x640xf32> to vector<2x640xf32>
    %44 = arith.addf %41, %43 : vector<2x640xf32>
    %45 = vector.extract_strided_slice %44 {offsets = [0, 0], sizes = [2, 512], strides = [1, 1]} : vector<2x640xf32> to vector<2x512xf32>
    %46 = vector.extract_strided_slice %44 {offsets = [0, 512], sizes = [2, 128], strides = [1, 1]} : vector<2x640xf32> to vector<2x128xf32>
    %47 = vector.extract_strided_slice %45 {offsets = [0, 0], sizes = [2, 128], strides = [1, 1]} : vector<2x512xf32> to vector<2x128xf32>
    %48 = vector.extract_strided_slice %45 {offsets = [0, 128], sizes = [2, 128], strides = [1, 1]} : vector<2x512xf32> to vector<2x128xf32>
    %49 = arith.addf %47, %48 : vector<2x128xf32>
    %50 = vector.extract_strided_slice %45 {offsets = [0, 256], sizes = [2, 128], strides = [1, 1]} : vector<2x512xf32> to vector<2x128xf32>
    %51 = arith.addf %49, %50 : vector<2x128xf32>
    %52 = vector.extract_strided_slice %45 {offsets = [0, 384], sizes = [2, 128], strides = [1, 1]} : vector<2x512xf32> to vector<2x128xf32>
    %53 = arith.addf %51, %52 : vector<2x128xf32>
    %cst_24 = arith.constant 2.500000e-01 : f32
    %54 = vector.broadcast %cst_24 : f32 to vector<2x128xf32>
    %55 = arith.mulf %53, %54 : vector<2x128xf32>
    %56 = arith.subf %46, %55 : vector<2x128xf32>
    %57 = vector.extract_strided_slice %45 {offsets = [0, 0], sizes = [2, 128], strides = [1, 1]} : vector<2x512xf32> to vector<2x128xf32>
    %58 = arith.addf %56, %57 : vector<2x128xf32>
    %cst_25 = arith.constant dense<0xFF800000> : vector<2xf32>
    %59 = vector.multi_reduction <maximumf>, %58, %cst_25 [1] : vector<2x128xf32> to vector<2xf32>
    %60 = vector.shape_cast %59 : vector<2xf32> to vector<2x1xf32>
    %61 = vector.broadcast %60 : vector<2x1xf32> to vector<2x128xf32>
    %62 = arith.subf %58, %61 : vector<2x128xf32>
    %63 = math.exp %62 : vector<2x128xf32>
    %cst_26 = arith.constant dense<0.000000e+00> : vector<2xf32>
    %64 = vector.multi_reduction <add>, %63, %cst_26 [1] : vector<2x128xf32> to vector<2xf32>
    %65 = vector.shape_cast %64 : vector<2xf32> to vector<2x1xf32>
    %66 = tpu.reciprocal %65 {approx = true} : vector<2x1xf32> -> vector<2x1xf32>
    %67 = vector.broadcast %66 : vector<2x1xf32> to vector<2x128xf32>
    %68 = arith.mulf %63, %67 : vector<2x128xf32>
    %cst_27 = arith.constant 1.000000e-03 : f32
    %69 = vector.broadcast %cst_27 : f32 to vector<2x128xf32>
    %70 = arith.maximumf %68, %69 : vector<2x128xf32>
    %71 = arith.truncf %70 : vector<2x128xf32> to vector<2x128xbf16>
    %c0_28 = arith.constant 0 : index
    %c0_29 = arith.constant 0 : index
    %72 = vector.load %arg10[%c0_28, %c0_29] : memref<2x512xbf16, #tpu.memory_space<vmem>>, vector<2x128xbf16>
    tpu.vector_store %arg10[%c0_28, %c0_29], %71 {strides = array<i32>} : memref<2x512xbf16, #tpu.memory_space<vmem>>, vector<2x128xbf16>,
    %73 = vector.extract_strided_slice %45 {offsets = [0, 128], sizes = [2, 128], strides = [1, 1]} : vector<2x512xf32> to vector<2x128xf32>
    %74 = arith.addf %56, %73 : vector<2x128xf32>
    %cst_30 = arith.constant dense<0xFF800000> : vector<2xf32>
    %75 = vector.multi_reduction <maximumf>, %74, %cst_30 [1] : vector<2x128xf32> to vector<2xf32>
    %76 = vector.shape_cast %75 : vector<2xf32> to vector<2x1xf32>
    %77 = vector.broadcast %76 : vector<2x1xf32> to vector<2x128xf32>
    %78 = arith.subf %74, %77 : vector<2x128xf32>
    %79 = math.exp %78 : vector<2x128xf32>
    %cst_31 = arith.constant dense<0.000000e+00> : vector<2xf32>
    %80 = vector.multi_reduction <add>, %79, %cst_31 [1] : vector<2x128xf32> to vector<2xf32>
    %81 = vector.shape_cast %80 : vector<2xf32> to vector<2x1xf32>
    %82 = tpu.reciprocal %81 {approx = true} : vector<2x1xf32> -> vector<2x1xf32>
    %83 = vector.broadcast %82 : vector<2x1xf32> to vector<2x128xf32>
    %84 = arith.mulf %79, %83 : vector<2x128xf32>
    %cst_32 = arith.constant 1.000000e-03 : f32
    %85 = vector.broadcast %cst_32 : f32 to vector<2x128xf32>
    %86 = arith.maximumf %84, %85 : vector<2x128xf32>
    %87 = arith.truncf %86 : vector<2x128xf32> to vector<2x128xbf16>
    %c0_33 = arith.constant 0 : index
    %c128 = arith.constant 128 : index
    %88 = vector.load %arg10[%c0_33, %c128] : memref<2x512xbf16, #tpu.memory_space<vmem>>, vector<2x128xbf16>
    tpu.vector_store %arg10[%c0_33, %c128], %87 {strides = array<i32>} : memref<2x512xbf16, #tpu.memory_space<vmem>>, vector<2x128xbf16>,
    %89 = vector.extract_strided_slice %45 {offsets = [0, 256], sizes = [2, 128], strides = [1, 1]} : vector<2x512xf32> to vector<2x128xf32>
    %90 = arith.addf %56, %89 : vector<2x128xf32>
    %cst_34 = arith.constant dense<0xFF800000> : vector<2xf32>
    %91 = vector.multi_reduction <maximumf>, %90, %cst_34 [1] : vector<2x128xf32> to vector<2xf32>
    %92 = vector.shape_cast %91 : vector<2xf32> to vector<2x1xf32>
    %93 = vector.broadcast %92 : vector<2x1xf32> to vector<2x128xf32>
    %94 = arith.subf %90, %93 : vector<2x128xf32>
    %95 = math.exp %94 : vector<2x128xf32>
    %cst_35 = arith.constant dense<0.000000e+00> : vector<2xf32>
    %96 = vector.multi_reduction <add>, %95, %cst_35 [1] : vector<2x128xf32> to vector<2xf32>
    %97 = vector.shape_cast %96 : vector<2xf32> to vector<2x1xf32>
    %98 = tpu.reciprocal %97 {approx = true} : vector<2x1xf32> -> vector<2x1xf32>
    %99 = vector.broadcast %98 : vector<2x1xf32> to vector<2x128xf32>
    %100 = arith.mulf %95, %99 : vector<2x128xf32>
    %cst_36 = arith.constant 1.000000e-03 : f32
    %101 = vector.broadcast %cst_36 : f32 to vector<2x128xf32>
    %102 = arith.maximumf %100, %101 : vector<2x128xf32>
    %103 = arith.truncf %102 : vector<2x128xf32> to vector<2x128xbf16>
    %c0_37 = arith.constant 0 : index
    %c256 = arith.constant 256 : index
    %104 = vector.load %arg10[%c0_37, %c256] : memref<2x512xbf16, #tpu.memory_space<vmem>>, vector<2x128xbf16>
    tpu.vector_store %arg10[%c0_37, %c256], %103 {strides = array<i32>} : memref<2x512xbf16, #tpu.memory_space<vmem>>, vector<2x128xbf16>,
    %105 = vector.extract_strided_slice %45 {offsets = [0, 384], sizes = [2, 128], strides = [1, 1]} : vector<2x512xf32> to vector<2x128xf32>
    %106 = arith.addf %56, %105 : vector<2x128xf32>
    %cst_38 = arith.constant dense<0xFF800000> : vector<2xf32>
    %107 = vector.multi_reduction <maximumf>, %106, %cst_38 [1] : vector<2x128xf32> to vector<2xf32>
    %108 = vector.shape_cast %107 : vector<2xf32> to vector<2x1xf32>
    %109 = vector.broadcast %108 : vector<2x1xf32> to vector<2x128xf32>
    %110 = arith.subf %106, %109 : vector<2x128xf32>
    %111 = math.exp %110 : vector<2x128xf32>
    %cst_39 = arith.constant dense<0.000000e+00> : vector<2xf32>
    %112 = vector.multi_reduction <add>, %111, %cst_39 [1] : vector<2x128xf32> to vector<2xf32>
    %113 = vector.shape_cast %112 : vector<2xf32> to vector<2x1xf32>
    %114 = tpu.reciprocal %113 {approx = true} : vector<2x1xf32> -> vector<2x1xf32>
    %115 = vector.broadcast %114 : vector<2x1xf32> to vector<2x128xf32>
    %116 = arith.mulf %111, %115 : vector<2x128xf32>
    %cst_40 = arith.constant 1.000000e-03 : f32
    %117 = vector.broadcast %cst_40 : f32 to vector<2x128xf32>
    %118 = arith.maximumf %116, %117 : vector<2x128xf32>
    %119 = arith.truncf %118 : vector<2x128xf32> to vector<2x128xbf16>
    %c0_41 = arith.constant 0 : index
    %c384 = arith.constant 384 : index
    %120 = vector.load %arg10[%c0_41, %c384] : memref<2x512xbf16, #tpu.memory_space<vmem>>, vector<2x128xbf16>
    tpu.vector_store %arg10[%c0_41, %c384], %119 {strides = array<i32>} : memref<2x512xbf16, #tpu.memory_space<vmem>>, vector<2x128xbf16>,
    return
  }
  func.func @transform_0(%arg0: i32) -> (i32, i32) {
    %c0_i32 = arith.constant 0 : i32
    %c0_i32_0 = arith.constant 0 : i32
    return %arg0, %c0_i32 : i32, i32
  }
  func.func @transform_1(%arg0: i32) -> (i32, i32) {
    %c0_i32 = arith.constant 0 : i32
    %c0_i32_0 = arith.constant 0 : i32
    %c0_i32_1 = arith.constant 0 : i32
    return %c0_i32, %c0_i32_0 : i32, i32
  }
  func.func @transform_2(%arg0: i32) -> (i32, i32) {
    %c0_i32 = arith.constant 0 : i32
    %c0_i32_0 = arith.constant 0 : i32
    %c0_i32_1 = arith.constant 0 : i32
    return %c0_i32, %c0_i32_0 : i32, i32
  }
  func.func @transform_3(%arg0: i32) -> (i32, i32) {
    %c0_i32 = arith.constant 0 : i32
    %c0_i32_0 = arith.constant 0 : i32
    %c0_i32_1 = arith.constant 0 : i32
    return %c0_i32, %c0_i32_0 : i32, i32
  }
  func.func @transform_4(%arg0: i32) -> (i32, i32) {
    %c0_i32 = arith.constant 0 : i32
    %c0_i32_0 = arith.constant 0 : i32
    %c0_i32_1 = arith.constant 0 : i32
    return %c0_i32, %c0_i32_0 : i32, i32
  }
  func.func @transform_5(%arg0: i32) -> (i32, i32) {
    %c0_i32 = arith.constant 0 : i32
    %c0_i32_0 = arith.constant 0 : i32
    %c0_i32_1 = arith.constant 0 : i32
    return %c0_i32, %c0_i32_0 : i32, i32
  }
  func.func @transform_6(%arg0: i32) -> (i32, i32) {
    %c0_i32 = arith.constant 0 : i32
    %c0_i32_0 = arith.constant 0 : i32
    %c0_i32_1 = arith.constant 0 : i32
    return %c0_i32, %c0_i32_0 : i32, i32
  }
  func.func @transform_7(%arg0: i32) -> (i32, i32) {
    %c0_i32 = arith.constant 0 : i32
    %c0_i32_0 = arith.constant 0 : i32
    %c0_i32_1 = arith.constant 0 : i32
    return %c0_i32, %c0_i32_0 : i32, i32
  }
  func.func @transform_8(%arg0: i32) -> (i32, i32) {
    %c0_i32 = arith.constant 0 : i32
    %c0_i32_0 = arith.constant 0 : i32
    %c0_i32_1 = arith.constant 0 : i32
    return %c0_i32, %c0_i32_0 : i32, i32
  }
  func.func @transform_9(%arg0: i32) -> (i32, i32) {
    %c0_i32 = arith.constant 0 : i32
    %c0_i32_0 = arith.constant 0 : i32
    return %arg0, %c0_i32 : i32, i32
  }
}

</mosaic_0001>

<llo_original>
// kernel: rainbow_forward.1
$region0: #{rainbow_forward.1}
  #allocation0 [shape = 'u32[]', space=smem, size = 0x4, offset = 0x4, fixed_abs, tag = 'smem constant byte address 0x4 - core index']
  #allocation1 [shape = 'u32[72,128]{1,0:T(1,128)}', space=vmem, size = 0x9000, scoped, tag = 'internal scratch']
  %s0 = inlined_call_operand.vmem [shape: bf16[2,32], index: 0, kind: input, shape index: {}]
  %s1 = inlined_call_operand.hbm [shape: bf16[32,128], index: 1, kind: input, shape index: {}]
  %s2 = inlined_call_operand.vmem [shape: f32[1,128], index: 2, kind: input, shape index: {}]
  %s3 = inlined_call_operand.hbm [shape: bf16[128,384], index: 3, kind: input, shape index: {}]
  %s4 = inlined_call_operand.vmem [shape: f32[1,384], index: 4, kind: input, shape index: {}]
  %s5 = inlined_call_operand.hbm [shape: bf16[128,256], index: 5, kind: input, shape index: {}]
  %s6 = inlined_call_operand.hbm [shape: f32[1,256], index: 6, kind: input, shape index: {}]
  %s7 = inlined_call_operand.hbm [shape: bf16[256,640], index: 7, kind: input, shape index: {}]
  %s8 = inlined_call_operand.vmem [shape: f32[1,640], index: 8, kind: input, shape index: {}]
  %s9 = inlined_call_operand.vmem [shape: bf16[2,512], index: 9, kind: output, shape index: {}]
  %s10 = sld [smem:[#allocation0]]
  $region66: #{rainbow_forward.1} parent=0
    _
  %s12 = ssub.s32 1, %s10
  %s13 = scalar_select 0, %s12, %s10
  $region1: #{rainbow_forward.1} parent=0
    #allocation2 [shape = 'u8[8192]{0}', space=vmem, size = 0x2000, scoped, tag = 'input window, operand 1, single buffered']
    #allocation3 [shape = 's32[1]{0}', space=sflag, size = 0x4, scoped, tag = 'scoped memory for rainbow_forward.1']
    #allocation4 [shape = 'u8[98304]{0}', space=vmem, size = 0x18000, scoped, tag = 'input window, operand 3, single buffered']
    #allocation5 [shape = 's32[1]{0}', space=sflag, size = 0x4, scoped, tag = 'scoped memory for rainbow_forward.1']
    #allocation6 [shape = 'u8[65536]{0}', space=vmem, size = 0x10000, scoped, tag = 'input window, operand 5, single buffered']
    #allocation7 [shape = 'u8[1024]{0}', space=vmem, size = 0x400, scoped, tag = 'input window, operand 6, single buffered']
    #allocation8 [shape = 's32[1]{0}', space=sflag, size = 0x4, scoped, tag = 'scoped memory for rainbow_forward.1']
    #allocation9 [shape = 'u8[327680]{0}', space=vmem, size = 0x50000, scoped, tag = 'input window, operand 7, single buffered']
    %14 = vsyncpa [#allocation3], 0
    %15 = vsyncpa [#allocation5], 0
    %16 = vsyncpa [#allocation8], 0
    // Predicated region
    $region2: #{rainbow_forward.1} parent=1 // pred_check
      _
    $region3: #{rainbow_forward.1} parent=1 // pred_check_branch
      %18 = sbr.rel (0) target = $region5
    $region4: #{rainbow_forward.1} parent=1 // pred_region
      _
    $region5: #{rainbow_forward.1} parent=1 // pred_fallthru
      _
    // Predicated region
    $region6: #{rainbow_forward.1} parent=1 // pred_check
      _
    $region7: #{rainbow_forward.1} parent=1 // pred_check_branch
      %20 = sbr.rel (0) target = $region9
    $region8: #{rainbow_forward.1} parent=1 // pred_region
      %22 = vsyncadd [#allocation3], 0
      %s23 = sshll.u32 %s1, 4
      %s24 = int_to_ptr.hbm [resolvable:$true] %s23
      %s25 = sshll.u32 [#allocation2], 4
      %s26 = int_to_ptr.vmem [resolvable:$true] %s25
      %31 = dma.hbm_to_vmem [thread:$0]  %s24, 256, %s26, [#allocation3], 64, 64, 4
    $region9: #{rainbow_forward.1} parent=1 // pred_fallthru
      _
    // Predicated region
    $region10: #{rainbow_forward.1} parent=1 // pred_check
      _
    $region11: #{rainbow_forward.1} parent=1 // pred_check_branch
      %33 = sbr.rel (0) target = $region13
    $region12: #{rainbow_forward.1} parent=1 // pred_region
      _
    $region13: #{rainbow_forward.1} parent=1 // pred_fallthru
      _
    // Predicated region
    $region14: #{rainbow_forward.1} parent=1 // pred_check
      _
    $region15: #{rainbow_forward.1} parent=1 // pred_check_branch
      %35 = sbr.rel (0) target = $region17
    $region16: #{rainbow_forward.1} parent=1 // pred_region
      %37 = vsyncadd [#allocation5], 0
      %s38 = sshll.u32 %s3, 4
      %s39 = int_to_ptr.hbm [resolvable:$true] %s38
      %s40 = sshll.u32 [#allocation4], 4
      %s41 = int_to_ptr.vmem [resolvable:$true] %s40
      %46 = dma.hbm_to_vmem [thread:$0]  %s39, 3072, %s41, [#allocation5], 192, 192, 12
    $region17: #{rainbow_forward.1} parent=1 // pred_fallthru
      _
    // Predicated region
    $region18: #{rainbow_forward.1} parent=1 // pred_check
      _
    $region19: #{rainbow_forward.1} parent=1 // pred_check_branch
      %48 = sbr.rel (0) target = $region21
    $region20: #{rainbow_forward.1} parent=1 // pred_region
      _
    $region21: #{rainbow_forward.1} parent=1 // pred_fallthru
      _
    // Predicated region
    $region22: #{rainbow_forward.1} parent=1 // pred_check
      _
    $region23: #{rainbow_forward.1} parent=1 // pred_check_branch
      %50 = sbr.rel (0) target = $region25
    $region24: #{rainbow_forward.1} parent=1 // pred_region
      %52 = vsyncadd [#allocation5], 0
      %s53 = sshll.u32 %s5, 4
      %s54 = int_to_ptr.hbm [resolvable:$true] %s53
      %s55 = sshll.u32 [#allocation6], 4
      %s56 = int_to_ptr.vmem [resolvable:$true] %s55
      %61 = dma.hbm_to_vmem [thread:$0]  %s54, 2048, %s56, [#allocation5], 128, 128, 8
    $region25: #{rainbow_forward.1} parent=1 // pred_fallthru
      _
    // Predicated region
    $region26: #{rainbow_forward.1} parent=1 // pred_check
      _
    $region27: #{rainbow_forward.1} parent=1 // pred_check_branch
      %63 = sbr.rel (0) target = $region29
    $region28: #{rainbow_forward.1} parent=1 // pred_region
      %65 = vsyncadd [#allocation8], 0
      %s67 = sshll.u32 %s6, 4
      %s68 = int_to_ptr.hbm [resolvable:$true] %s67
      %s69 = sshll.u32 [#allocation7], 4
      %s70 = int_to_ptr.vmem [resolvable:$true] %s69
      %72 = dma.hbm_to_vmem [thread:$0]  %s68, 32, %s70, [#allocation8]
    $region29: #{rainbow_forward.1} parent=1 // pred_fallthru
      _
    // Predicated region
    $region30: #{rainbow_forward.1} parent=1 // pred_check
      _
    $region31: #{rainbow_forward.1} parent=1 // pred_check_branch
      %74 = sbr.rel (0) target = $region33
    $region32: #{rainbow_forward.1} parent=1 // pred_region
      %76 = vsyncadd [#allocation8], 0
      %s77 = sshll.u32 %s7, 4
      %s78 = int_to_ptr.hbm [resolvable:$true] %s77
      %s79 = sshll.u32 [#allocation9], 4
      %s80 = int_to_ptr.vmem [resolvable:$true] %s79
      %85 = dma.hbm_to_vmem [thread:$0]  %s78, 10240, %s80, [#allocation8], 320, 320, 20
    $region33: #{rainbow_forward.1} parent=1 // pred_fallthru
      _
    // Predicated region
    $region34: #{rainbow_forward.1} parent=1 // pred_check
      _
    $region35: #{rainbow_forward.1} parent=1 // pred_check_branch
      %87 = sbr.rel (0) target = $region37
    $region36: #{rainbow_forward.1} parent=1 // pred_region
      _
    $region37: #{rainbow_forward.1} parent=1 // pred_fallthru
      _
    // Predicated region
    $region38: #{rainbow_forward.1} parent=1 // pred_check
      _
    $region39: #{rainbow_forward.1} parent=1 // pred_check_branch
      %89 = sbr.rel (0) target = $region41
    $region40: #{rainbow_forward.1} parent=1 // pred_region
      %91 = dma.done [#allocation3], 256
    $region41: #{rainbow_forward.1} parent=1 // pred_fallthru
      _
    // Predicated region
    $region42: #{rainbow_forward.1} parent=1 // pred_check
      _
    $region43: #{rainbow_forward.1} parent=1 // pred_check_branch
      %93 = sbr.rel (0) target = $region45
    $region44: #{rainbow_forward.1} parent=1 // pred_region
      %95 = dma.done [#allocation5], 3072
    $region45: #{rainbow_forward.1} parent=1 // pred_fallthru
      _
    // Predicated region
    $region46: #{rainbow_forward.1} parent=1 // pred_check
      _
    $region47: #{rainbow_forward.1} parent=1 // pred_check_branch
      %97 = sbr.rel (0) target = $region49
    $region48: #{rainbow_forward.1} parent=1 // pred_region
      %99 = dma.done [#allocation5], 2048
    $region49: #{rainbow_forward.1} parent=1 // pred_fallthru
      _
    // Predicated region
    $region50: #{rainbow_forward.1} parent=1 // pred_check
      _
    $region51: #{rainbow_forward.1} parent=1 // pred_check_branch
      %101 = sbr.rel (0) target = $region53
    $region52: #{rainbow_forward.1} parent=1 // pred_region
      %103 = dma.done [#allocation8], 32
    $region53: #{rainbow_forward.1} parent=1 // pred_fallthru
      _
    // Predicated region
    $region54: #{rainbow_forward.1} parent=1 // pred_check
      _
    $region55: #{rainbow_forward.1} parent=1 // pred_check_branch
      %105 = sbr.rel (0) target = $region57
    $region56: #{rainbow_forward.1} parent=1 // pred_region
      %107 = dma.done [#allocation8], 10240
    $region57: #{rainbow_forward.1} parent=1 // pred_fallthru
      _
    %v109 = vld [vmem:[%s0] sm:$0x1]
    %v110 = vld [vmem:[#allocation2] sm:$0xf]
    %v111 = vld [vmem:[#allocation2 + $0x4] sm:$0xf]
    %v112 = vld [vmem:[#allocation2 + $0x8] sm:$0xf]
    %v113 = vld [vmem:[#allocation2 + $0xc] sm:$0xf]
    %v114 = vld [vmem:[%s2] sm:$0x1]
    %v116 = vperm.slane %v114, 0
    %v122 = vunpack.c.l.b16 %v110
    %v123 = vunpack.c.l.b16 %v111
    %v124 = vunpack.c.l.b16 %v112
    %v125 = vunpack.c.l.b16 %v113
    %v126 = vpack.c.b16 %v123, %v122
    %v127 = vpack.c.b16 %v125, %v124
    %vm130 = vcmask 261120
    %v132 = vsel %vm130, %v109, 0
    %134 = vmatpush.bf16.msra.mxu0 0
    %135 = vmatpush.bf16.msra.mxu0 0
    %136 = vmatpush.bf16.msra.mxu0 0
    %137 = vmatpush.bf16.msra.mxu0 0
    %138 = vmatpush.bf16.msra.mxu0 0
    %139 = vmatpush.bf16.msra.mxu0 0
    %140 = vmatpush.bf16.msra.mxu0 %v127
    %141 = vmatpush.bf16.msra.mxu0 %v126
    %142 = vmatmul.bf16.gmra.mxu0 %v132
    %v143 = vpop.f32.mrf.mxu0
    %v144 = vadd.f32 %v116, %v143
    %v145 = vpop.f32.mrf.mxu0
    %146 = vdwg.mxu0
    %v147 = vmax.f32 %v144, 0.0
    %v148 = vpack.c.bf16 %v147, %v147
    %v149 = vld [vmem:[#allocation4] sm:$0xff]
    %v150 = vld [vmem:[#allocation4 + $0x8] sm:$0xf]
    %v151 = vld [vmem:[#allocation4 + $0xc] sm:$0xff]
    %v152 = vld [vmem:[#allocation4 + $0x14] sm:$0xf]
    %v153 = vld [vmem:[#allocation4 + $0x18] sm:$0xff]
    %v154 = vld [vmem:[#allocation4 + $0x20] sm:$0xf]
    %v155 = vld [vmem:[#allocation4 + $0x24] sm:$0xff]
    %v156 = vld [vmem:[#allocation4 + $0x2c] sm:$0xf]
    %v157 = vld [vmem:[#allocation4 + $0x30] sm:$0xff]
    %v158 = vld [vmem:[#allocation4 + $0x38] sm:$0xf]
    %v159 = vld [vmem:[#allocation4 + $0x3c] sm:$0xff]
    %v160 = vld [vmem:[#allocation4 + $0x44] sm:$0xf]
    %v161 = vld [vmem:[#allocation4 + $0x48] sm:$0xff]
    %v162 = vld [vmem:[#allocation4 + $0x50] sm:$0xf]
    %v163 = vld [vmem:[#allocation4 + $0x54] sm:$0xff]
    %v164 = vld [vmem:[#allocation4 + $0x5c] sm:$0xf]
    %v165 = vld [vmem:[#allocation4 + $0x60] sm:$0xff]
    %v166 = vld [vmem:[#allocation4 + $0x68] sm:$0xf]
    %v167 = vld [vmem:[#allocation4 + $0x6c] sm:$0xff]
    %v168 = vld [vmem:[#allocation4 + $0x74] sm:$0xf]
    %v169 = vld [vmem:[#allocation4 + $0x78] sm:$0xff]
    %v170 = vld [vmem:[#allocation4 + $0x80] sm:$0xf]
    %v171 = vld [vmem:[#allocation4 + $0x84] sm:$0xff]
    %v172 = vld [vmem:[#allocation4 + $0x8c] sm:$0xf]
    %v173 = vld [vmem:[#allocation4 + $0x90] sm:$0xff]
    %v174 = vld [vmem:[#allocation4 + $0x98] sm:$0xf]
    %v175 = vld [vmem:[#allocation4 + $0x9c] sm:$0xff]
    %v176 = vld [vmem:[#allocation4 + $0xa4] sm:$0xf]
    %v177 = vld [vmem:[#allocation4 + $0xa8] sm:$0xff]
    %v178 = vld [vmem:[#allocation4 + $0xb0] sm:$0xf]
    %v179 = vld [vmem:[#allocation4 + $0xb4] sm:$0xff]
    %v180 = vld [vmem:[#allocation4 + $0xbc] sm:$0xf]
    %v181 = vld [vmem:[%s4] sm:$0x7]
    %v183 = vperm.slane %v181, 0
    %v184 = vperm.slane %v181, 1
    %v185 = vperm.slane %v181, 2
    %v221 = vunpack.c.l.b16 %v149
    %v222 = vunpack.c.h.b16 %v149
    %v223 = vunpack.c.l.b16 %v150
    %v224 = vunpack.c.l.b16 %v151
    %v225 = vunpack.c.h.b16 %v151
    %v226 = vunpack.c.l.b16 %v152
    %v227 = vunpack.c.l.b16 %v153
    %v228 = vunpack.c.h.b16 %v153
    %v229 = vunpack.c.l.b16 %v154
    %v230 = vunpack.c.l.b16 %v155
    %v231 = vunpack.c.h.b16 %v155
    %v232 = vunpack.c.l.b16 %v156
    %v233 = vunpack.c.l.b16 %v157
    %v234 = vunpack.c.h.b16 %v157
    %v235 = vunpack.c.l.b16 %v158
    %v236 = vunpack.c.l.b16 %v159
    %v237 = vunpack.c.h.b16 %v159
    %v238 = vunpack.c.l.b16 %v160
    %v239 = vunpack.c.l.b16 %v161
    %v240 = vunpack.c.h.b16 %v161
    %v241 = vunpack.c.l.b16 %v162
    %v242 = vunpack.c.l.b16 %v163
    %v243 = vunpack.c.h.b16 %v163
    %v244 = vunpack.c.l.b16 %v164
    %v245 = vunpack.c.l.b16 %v165
    %v246 = vunpack.c.h.b16 %v165
    %v247 = vunpack.c.l.b16 %v166
    %v248 = vunpack.c.l.b16 %v167
    %v249 = vunpack.c.h.b16 %v167
    %v250 = vunpack.c.l.b16 %v168
    %v251 = vunpack.c.l.b16 %v169
    %v252 = vunpack.c.h.b16 %v169
    %v253 = vunpack.c.l.b16 %v170
    %v254 = vunpack.c.l.b16 %v171
    %v255 = vunpack.c.h.b16 %v171
    %v256 = vunpack.c.l.b16 %v172
    %v257 = vunpack.c.l.b16 %v173
    %v258 = vunpack.c.h.b16 %v173
    %v259 = vunpack.c.l.b16 %v174
    %v260 = vunpack.c.l.b16 %v175
    %v261 = vunpack.c.h.b16 %v175
    %v262 = vunpack.c.l.b16 %v176
    %v263 = vunpack.c.l.b16 %v177
    %v264 = vunpack.c.h.b16 %v177
    %v265 = vunpack.c.l.b16 %v178
    %v266 = vunpack.c.l.b16 %v179
    %v267 = vunpack.c.h.b16 %v179
    %v268 = vunpack.c.l.b16 %v180
    %v269 = vpack.c.b16 %v224, %v221
    %v270 = vpack.c.b16 %v225, %v222
    %v271 = vpack.c.b16 %v226, %v223
    %v272 = vpack.c.b16 %v230, %v227
    %v273 = vpack.c.b16 %v231, %v228
    %v274 = vpack.c.b16 %v232, %v229
    %v275 = vpack.c.b16 %v236, %v233
    %v276 = vpack.c.b16 %v237, %v234
    %v277 = vpack.c.b16 %v238, %v235
    %v278 = vpack.c.b16 %v242, %v239
    %v279 = vpack.c.b16 %v243, %v240
    %v280 = vpack.c.b16 %v244, %v241
    %v281 = vpack.c.b16 %v248, %v245
    %v282 = vpack.c.b16 %v249, %v246
    %v283 = vpack.c.b16 %v250, %v247
    %v284 = vpack.c.b16 %v254, %v251
    %v285 = vpack.c.b16 %v255, %v252
    %v286 = vpack.c.b16 %v256, %v253
    %v287 = vpack.c.b16 %v260, %v257
    %v288 = vpack.c.b16 %v261, %v258
    %v289 = vpack.c.b16 %v262, %v259
    %v290 = vpack.c.b16 %v266, %v263
    %v291 = vpack.c.b16 %v267, %v264
    %v292 = vpack.c.b16 %v268, %v265
    %317 = vmatpush.bf16.msra.mxu0 %v290
    %318 = vmatpush.bf16.msra.mxu0 %v287
    %319 = vmatpush.bf16.msra.mxu0 %v284
    %320 = vmatpush.bf16.msra.mxu0 %v281
    %321 = vmatpush.bf16.msra.mxu0 %v278
    %322 = vmatpush.bf16.msra.mxu0 %v275
    %323 = vmatpush.bf16.msra.mxu0 %v272
    %324 = vmatpush.bf16.msra.mxu0 %v269
    %325 = vmatmul.bf16.gmra.mxu0 %v148
    %v326 = vpop.f32.mrf.mxu0
    %v327 = vadd.f32 %v183, %v326
    %v328 = vpop.f32.mrf.mxu0
    %329 = vdwg.mxu0
    %330 = vmatpush.bf16.msra.mxu0 %v291
    %331 = vmatpush.bf16.msra.mxu0 %v288
    %332 = vmatpush.bf16.msra.mxu0 %v285
    %333 = vmatpush.bf16.msra.mxu0 %v282
    %334 = vmatpush.bf16.msra.mxu0 %v279
    %335 = vmatpush.bf16.msra.mxu0 %v276
    %336 = vmatpush.bf16.msra.mxu0 %v273
    %337 = vmatpush.bf16.msra.mxu0 %v270
    %338 = vmatmul.bf16.gmra.mxu0 %v148
    %v339 = vpop.f32.mrf.mxu0
    %v340 = vadd.f32 %v184, %v339
    %v341 = vpop.f32.mrf.mxu0
    %342 = vdwg.mxu0
    %343 = vmatpush.bf16.msra.mxu0 %v292
    %344 = vmatpush.bf16.msra.mxu0 %v289
    %345 = vmatpush.bf16.msra.mxu0 %v286
    %346 = vmatpush.bf16.msra.mxu0 %v283
    %347 = vmatpush.bf16.msra.mxu0 %v280
    %348 = vmatpush.bf16.msra.mxu0 %v277
    %349 = vmatpush.bf16.msra.mxu0 %v274
    %350 = vmatpush.bf16.msra.mxu0 %v271
    %351 = vmatmul.bf16.gmra.mxu0 %v148
    %v352 = vpop.f32.mrf.mxu0
    %v353 = vadd.f32 %v185, %v352
    %v354 = vpop.f32.mrf.mxu0
    %355 = vdwg.mxu0
    %v356 = vxor.u32 %v327, 2147483648
    %v357 = vmul.f32 %v356, 1.442695
    %v358 = vpow.pop %v357
    %v359 = vadd.f32 %v358, 1.0
    %v360 = vrcp.pop %v359
    %v361 = vmul.f32 %v359, %v360
    %v362 = vsub.f32 1.0, %v361
    %v363 = vmul.f32 %v360, %v362
    %v364 = vadd.f32 %v360, %v363
    %vm365 = vweird.f32 %v359
    %vm366 = vweird.f32 %v360
    %vm367 = vmor %vm365, %vm366
    %v368 = vsel %vm367, %v360, %v364
    %v369 = vand.u32 2147483647, %v359
    %vm370 = vcmp.eq.f32.partialorder %v369, 8.507059e+37
    %v371 = vand.u32 %v359, 2147483648
    %v372 = vor.u32 1.1754944e-38, %v371
    %v373 = vsel %vm370, %v372, %v368
    %v374 = vmul.f32 1.0, %v373
    %v375 = vtanh.pop %v340
    %v376 = vxor.u32 %v353, 2147483648
    %v377 = vmul.f32 %v376, 1.442695
    %v378 = vpow.pop %v377
    %v379 = vadd.f32 %v378, 1.0
    %v380 = vrcp.pop %v379
    %v381 = vmul.f32 %v379, %v380
    %v382 = vsub.f32 1.0, %v381
    %v383 = vmul.f32 %v380, %v382
    %v384 = vadd.f32 %v380, %v383
    %vm385 = vweird.f32 %v379
    %vm386 = vweird.f32 %v380
    %vm387 = vmor %vm385, %vm386
    %v388 = vsel %vm387, %v380, %v384
    %v389 = vand.u32 2147483647, %v379
    %vm390 = vcmp.eq.f32.partialorder %v389, 8.507059e+37
    %v391 = vand.u32 %v379, 2147483648
    %v392 = vor.u32 1.1754944e-38, %v391
    %v393 = vsel %vm390, %v392, %v388
    %v394 = vmul.f32 1.0, %v393
    %v395 = vmul.f32 %v374, %v375
    %v396 = vtanh.pop %v395
    %v397 = vmul.f32 %v394, %v396
    %v398 = vpack.c.bf16 %v397, %v397
    %v399 = vld [vmem:[#allocation6] sm:$0xff]
    %v400 = vld [vmem:[#allocation6 + $0x8] sm:$0xff]
    %v401 = vld [vmem:[#allocation6 + $0x10] sm:$0xff]
    %v402 = vld [vmem:[#allocation6 + $0x18] sm:$0xff]
    %v403 = vld [vmem:[#allocation6 + $0x20] sm:$0xff]
    %v404 = vld [vmem:[#allocation6 + $0x28] sm:$0xff]
    %v405 = vld [vmem:[#allocation6 + $0x30] sm:$0xff]
    %v406 = vld [vmem:[#allocation6 + $0x38] sm:$0xff]
    %v407 = vld [vmem:[#allocation6 + $0x40] sm:$0xff]
    %v408 = vld [vmem:[#allocation6 + $0x48] sm:$0xff]
    %v409 = vld [vmem:[#allocation6 + $0x50] sm:$0xff]
    %v410 = vld [vmem:[#allocation6 + $0x58] sm:$0xff]
    %v411 = vld [vmem:[#allocation6 + $0x60] sm:$0xff]
    %v412 = vld [vmem:[#allocation6 + $0x68] sm:$0xff]
    %v413 = vld [vmem:[#allocation6 + $0x70] sm:$0xff]
    %v414 = vld [vmem:[#allocation6 + $0x78] sm:$0xff]
    %v415 = vld [vmem:[#allocation7] sm:$0x3]
    %v417 = vperm.slane %v415, 0
    %v418 = vperm.slane %v415, 1
    %v437 = vunpack.c.l.b16 %v399
    %v438 = vunpack.c.h.b16 %v399
    %v439 = vunpack.c.l.b16 %v400
    %v440 = vunpack.c.h.b16 %v400
    %v441 = vunpack.c.l.b16 %v401
    %v442 = vunpack.c.h.b16 %v401
    %v443 = vunpack.c.l.b16 %v402
    %v444 = vunpack.c.h.b16 %v402
    %v445 = vunpack.c.l.b16 %v403
    %v446 = vunpack.c.h.b16 %v403
    %v447 = vunpack.c.l.b16 %v404
    %v448 = vunpack.c.h.b16 %v404
    %v449 = vunpack.c.l.b16 %v405
    %v450 = vunpack.c.h.b16 %v405
    %v451 = vunpack.c.l.b16 %v406
    %v452 = vunpack.c.h.b16 %v406
    %v453 = vunpack.c.l.b16 %v407
    %v454 = vunpack.c.h.b16 %v407
    %v455 = vunpack.c.l.b16 %v408
    %v456 = vunpack.c.h.b16 %v408
    %v457 = vunpack.c.l.b16 %v409
    %v458 = vunpack.c.h.b16 %v409
    %v459 = vunpack.c.l.b16 %v410
    %v460 = vunpack.c.h.b16 %v410
    %v461 = vunpack.c.l.b16 %v411
    %v462 = vunpack.c.h.b16 %v411
    %v463 = vunpack.c.l.b16 %v412
    %v464 = vunpack.c.h.b16 %v412
    %v465 = vunpack.c.l.b16 %v413
    %v466 = vunpack.c.h.b16 %v413
    %v467 = vunpack.c.l.b16 %v414
    %v468 = vunpack.c.h.b16 %v414
    %v469 = vpack.c.b16 %v439, %v437
    %v470 = vpack.c.b16 %v440, %v438
    %v471 = vpack.c.b16 %v443, %v441
    %v472 = vpack.c.b16 %v444, %v442
    %v473 = vpack.c.b16 %v447, %v445
    %v474 = vpack.c.b16 %v448, %v446
    %v475 = vpack.c.b16 %v451, %v449
    %v476 = vpack.c.b16 %v452, %v450
    %v477 = vpack.c.b16 %v455, %v453
    %v478 = vpack.c.b16 %v456, %v454
    %v479 = vpack.c.b16 %v459, %v457
    %v480 = vpack.c.b16 %v460, %v458
    %v481 = vpack.c.b16 %v463, %v461
    %v482 = vpack.c.b16 %v464, %v462
    %v483 = vpack.c.b16 %v467, %v465
    %v484 = vpack.c.b16 %v468, %v466
    %501 = vmatpush.bf16.msra.mxu0 %v483
    %502 = vmatpush.bf16.msra.mxu0 %v481
    %503 = vmatpush.bf16.msra.mxu0 %v479
    %504 = vmatpush.bf16.msra.mxu0 %v477
    %505 = vmatpush.bf16.msra.mxu0 %v475
    %506 = vmatpush.bf16.msra.mxu0 %v473
    %507 = vmatpush.bf16.msra.mxu0 %v471
    %508 = vmatpush.bf16.msra.mxu0 %v469
    %509 = vmatmul.bf16.gmra.mxu0 %v398
    %v510 = vpop.f32.mrf.mxu0
    %v511 = vadd.f32 %v417, %v510
    %v512 = vpop.f32.mrf.mxu0
    %513 = vdwg.mxu0
    %514 = vmatpush.bf16.msra.mxu0 %v484
    %515 = vmatpush.bf16.msra.mxu0 %v482
    %516 = vmatpush.bf16.msra.mxu0 %v480
    %517 = vmatpush.bf16.msra.mxu0 %v478
    %518 = vmatpush.bf16.msra.mxu0 %v476
    %519 = vmatpush.bf16.msra.mxu0 %v474
    %520 = vmatpush.bf16.msra.mxu0 %v472
    %521 = vmatpush.bf16.msra.mxu0 %v470
    %522 = vmatmul.bf16.gmra.mxu0 %v398
    %v523 = vpop.f32.mrf.mxu0
    %v524 = vadd.f32 %v418, %v523
    %v525 = vpop.f32.mrf.mxu0
    %526 = vdwg.mxu0
    %v527 = vmax.f32 %v511, 0.0
    %v528 = vmax.f32 %v524, 0.0
    %v529 = vpack.c.bf16 %v527, %v527
    %v530 = vpack.c.bf16 %v528, %v528
    %v531 = vld [vmem:[#allocation9] sm:$0xff]
    %v532 = vld [vmem:[#allocation9 + $0x8] sm:$0xff]
    %v533 = vld [vmem:[#allocation9 + $0x10] sm:$0xf]
    %v534 = vld [vmem:[#allocation9 + $0x14] sm:$0xff]
    %v535 = vld [vmem:[#allocation9 + $0x1c] sm:$0xff]
    %v536 = vld [vmem:[#allocation9 + $0x24] sm:$0xf]
    %v537 = vld [vmem:[#allocation9 + $0x28] sm:$0xff]
    %v538 = vld [vmem:[#allocation9 + $0x30] sm:$0xff]
    %v539 = vld [vmem:[#allocation9 + $0x38] sm:$0xf]
    %v540 = vld [vmem:[#allocation9 + $0x3c] sm:$0xff]
    %v541 = vld [vmem:[#allocation9 + $0x44] sm:$0xff]
    %v542 = vld [vmem:[#allocation9 + $0x4c] sm:$0xf]
    %v543 = vld [vmem:[#allocation9 + $0x50] sm:$0xff]
    %v544 = vld [vmem:[#allocation9 + $0x58] sm:$0xff]
    %v545 = vld [vmem:[#allocation9 + $0x60] sm:$0xf]
    %v546 = vld [vmem:[#allocation9 + $0x64] sm:$0xff]
    %v547 = vld [vmem:[#allocation9 + $0x6c] sm:$0xff]
    %v548 = vld [vmem:[#allocation9 + $0x74] sm:$0xf]
    %v549 = vld [vmem:[#allocation9 + $0x78] sm:$0xff]
    %v550 = vld [vmem:[#allocation9 + $0x80] sm:$0xff]
    %v551 = vld [vmem:[#allocation9 + $0x88] sm:$0xf]
    %v552 = vld [vmem:[#allocation9 + $0x8c] sm:$0xff]
    %v553 = vld [vmem:[#allocation9 + $0x94] sm:$0xff]
    %v554 = vld [vmem:[#allocation9 + $0x9c] sm:$0xf]
    %v555 = vld [vmem:[#allocation9 + $0xa0] sm:$0xff]
    %v556 = vld [vmem:[#allocation9 + $0xa8] sm:$0xff]
    %v557 = vld [vmem:[#allocation9 + $0xb0] sm:$0xf]
    %v558 = vld [vmem:[#allocation9 + $0xb4] sm:$0xff]
    %v559 = vld [vmem:[#allocation9 + $0xbc] sm:$0xff]
    %v560 = vld [vmem:[#allocation9 + $0xc4] sm:$0xf]
    %v561 = vld [vmem:[#allocation9 + $0xc8] sm:$0xff]
    %v562 = vld [vmem:[#allocation9 + $0xd0] sm:$0xff]
    %v563 = vld [vmem:[#allocation9 + $0xd8] sm:$0xf]
    %v564 = vld [vmem:[#allocation9 + $0xdc] sm:$0xff]
    %v565 = vld [vmem:[#allocation9 + $0xe4] sm:$0xff]
    %v566 = vld [vmem:[#allocation9 + $0xec] sm:$0xf]
    %v567 = vld [vmem:[#allocation9 + $0xf0] sm:$0xff]
    %v568 = vld [vmem:[#allocation9 + $0xf8] sm:$0xff]
    %v569 = vld [vmem:[#allocation9 + $0x100] sm:$0xf]
    %v570 = vld [vmem:[#allocation9 + $0x104] sm:$0xff]
    %v571 = vld [vmem:[#allocation9 + $0x10c] sm:$0xff]
    %v572 = vld [vmem:[#allocation9 + $0x114] sm:$0xf]
    %v573 = vld [vmem:[#allocation9 + $0x118] sm:$0xff]
    %v574 = vld [vmem:[#allocation9 + $0x120] sm:$0xff]
    %v575 = vld [vmem:[#allocation9 + $0x128] sm:$0xf]
    %v576 = vld [vmem:[#allocation9 + $0x12c] sm:$0xff]
    %v577 = vld [vmem:[#allocation9 + $0x134] sm:$0xff]
    %v578 = vld [vmem:[#allocation9 + $0x13c] sm:$0xf]
    %v579 = vld [vmem:[#allocation9 + $0x140] sm:$0xff]
    %v580 = vld [vmem:[#allocation9 + $0x148] sm:$0xff]
    %v581 = vld [vmem:[#allocation9 + $0x150] sm:$0xf]
    %v582 = vld [vmem:[#allocation9 + $0x154] sm:$0xff]
    %v583 = vld [vmem:[#allocation9 + $0x15c] sm:$0xff]
    %v584 = vld [vmem:[#allocation9 + $0x164] sm:$0xf]
    %v585 = vld [vmem:[#allocation9 + $0x168] sm:$0xff]
    %v586 = vld [vmem:[#allocation9 + $0x170] sm:$0xff]
    %v587 = vld [vmem:[#allocation9 + $0x178] sm:$0xf]
    %v588 = vld [vmem:[#allocation9 + $0x17c] sm:$0xff]
    %v589 = vld [vmem:[#allocation9 + $0x184] sm:$0xff]
    %v590 = vld [vmem:[#allocation9 + $0x18c] sm:$0xf]
    %v591 = vld [vmem:[#allocation9 + $0x190] sm:$0xff]
    %v592 = vld [vmem:[#allocation9 + $0x198] sm:$0xff]
    %v593 = vld [vmem:[#allocation9 + $0x1a0] sm:$0xf]
    %v594 = vld [vmem:[#allocation9 + $0x1a4] sm:$0xff]
    %v595 = vld [vmem:[#allocation9 + $0x1ac] sm:$0xff]
    %v596 = vld [vmem:[#allocation9 + $0x1b4] sm:$0xf]
    %v597 = vld [vmem:[#allocation9 + $0x1b8] sm:$0xff]
    %v598 = vld [vmem:[#allocation9 + $0x1c0] sm:$0xff]
    %v599 = vld [vmem:[#allocation9 + $0x1c8] sm:$0xf]
    %v600 = vld [vmem:[#allocation9 + $0x1cc] sm:$0xff]
    %v601 = vld [vmem:[#allocation9 + $0x1d4] sm:$0xff]
    %v602 = vld [vmem:[#allocation9 + $0x1dc] sm:$0xf]
    %v603 = vld [vmem:[#allocation9 + $0x1e0] sm:$0xff]
    %v604 = vld [vmem:[#allocation9 + $0x1e8] sm:$0xff]
    %v605 = vld [vmem:[#allocation9 + $0x1f0] sm:$0xf]
    %v606 = vld [vmem:[#allocation9 + $0x1f4] sm:$0xff]
    %v607 = vld [vmem:[#allocation9 + $0x1fc] sm:$0xff]
    %v608 = vld [vmem:[#allocation9 + $0x204] sm:$0xf]
    %v609 = vld [vmem:[#allocation9 + $0x208] sm:$0xff]
    %v610 = vld [vmem:[#allocation9 + $0x210] sm:$0xff]
    %v611 = vld [vmem:[#allocation9 + $0x218] sm:$0xf]
    %v612 = vld [vmem:[#allocation9 + $0x21c] sm:$0xff]
    %v613 = vld [vmem:[#allocation9 + $0x224] sm:$0xff]
    %v614 = vld [vmem:[#allocation9 + $0x22c] sm:$0xf]
    %v615 = vld [vmem:[#allocation9 + $0x230] sm:$0xff]
    %v616 = vld [vmem:[#allocation9 + $0x238] sm:$0xff]
    %v617 = vld [vmem:[#allocation9 + $0x240] sm:$0xf]
    %v618 = vld [vmem:[#allocation9 + $0x244] sm:$0xff]
    %v619 = vld [vmem:[#allocation9 + $0x24c] sm:$0xff]
    %v620 = vld [vmem:[#allocation9 + $0x254] sm:$0xf]
    %v621 = vld [vmem:[#allocation9 + $0x258] sm:$0xff]
    %v622 = vld [vmem:[#allocation9 + $0x260] sm:$0xff]
    %v623 = vld [vmem:[#allocation9 + $0x268] sm:$0xf]
    %v624 = vld [vmem:[#allocation9 + $0x26c] sm:$0xff]
    %v625 = vld [vmem:[#allocation9 + $0x274] sm:$0xff]
    %v626 = vld [vmem:[#allocation9 + $0x27c] sm:$0xf]
    %v627 = vld [vmem:[%s8] sm:$0x1f]
    %v629 = vperm.slane %v627, 0
    %v630 = vperm.slane %v627, 1
    %v631 = vperm.slane %v627, 2
    %v632 = vperm.slane %v627, 3
    %v633 = vperm.slane %v627, 4
    %v735 = vunpack.c.l.b16 %v531
    %v736 = vunpack.c.h.b16 %v531
    %v737 = vunpack.c.l.b16 %v532
    %v738 = vunpack.c.h.b16 %v532
    %v739 = vunpack.c.l.b16 %v533
    %v740 = vunpack.c.l.b16 %v534
    %v741 = vunpack.c.h.b16 %v534
    %v742 = vunpack.c.l.b16 %v535
    %v743 = vunpack.c.h.b16 %v535
    %v744 = vunpack.c.l.b16 %v536
    %v745 = vunpack.c.l.b16 %v537
    %v746 = vunpack.c.h.b16 %v537
    %v747 = vunpack.c.l.b16 %v538
    %v748 = vunpack.c.h.b16 %v538
    %v749 = vunpack.c.l.b16 %v539
    %v750 = vunpack.c.l.b16 %v540
    %v751 = vunpack.c.h.b16 %v540
    %v752 = vunpack.c.l.b16 %v541
    %v753 = vunpack.c.h.b16 %v541
    %v754 = vunpack.c.l.b16 %v542
    %v755 = vunpack.c.l.b16 %v543
    %v756 = vunpack.c.h.b16 %v543
    %v757 = vunpack.c.l.b16 %v544
    %v758 = vunpack.c.h.b16 %v544
    %v759 = vunpack.c.l.b16 %v545
    %v760 = vunpack.c.l.b16 %v546
    %v761 = vunpack.c.h.b16 %v546
    %v762 = vunpack.c.l.b16 %v547
    %v763 = vunpack.c.h.b16 %v547
    %v764 = vunpack.c.l.b16 %v548
    %v765 = vunpack.c.l.b16 %v549
    %v766 = vunpack.c.h.b16 %v549
    %v767 = vunpack.c.l.b16 %v550
    %v768 = vunpack.c.h.b16 %v550
    %v769 = vunpack.c.l.b16 %v551
    %v770 = vunpack.c.l.b16 %v552
    %v771 = vunpack.c.h.b16 %v552
    %v772 = vunpack.c.l.b16 %v553
    %v773 = vunpack.c.h.b16 %v553
    %v774 = vunpack.c.l.b16 %v554
    %v775 = vunpack.c.l.b16 %v555
    %v776 = vunpack.c.h.b16 %v555
    %v777 = vunpack.c.l.b16 %v556
    %v778 = vunpack.c.h.b16 %v556
    %v779 = vunpack.c.l.b16 %v557
    %v780 = vunpack.c.l.b16 %v558
    %v781 = vunpack.c.h.b16 %v558
    %v782 = vunpack.c.l.b16 %v559
    %v783 = vunpack.c.h.b16 %v559
    %v784 = vunpack.c.l.b16 %v560
    %v785 = vunpack.c.l.b16 %v561
    %v786 = vunpack.c.h.b16 %v561
    %v787 = vunpack.c.l.b16 %v562
    %v788 = vunpack.c.h.b16 %v562
    %v789 = vunpack.c.l.b16 %v563
    %v790 = vunpack.c.l.b16 %v564
    %v791 = vunpack.c.h.b16 %v564
    %v792 = vunpack.c.l.b16 %v565
    %v793 = vunpack.c.h.b16 %v565
    %v794 = vunpack.c.l.b16 %v566
    %v795 = vunpack.c.l.b16 %v567
    %v796 = vunpack.c.h.b16 %v567
    %v797 = vunpack.c.l.b16 %v568
    %v798 = vunpack.c.h.b16 %v568
    %v799 = vunpack.c.l.b16 %v569
    %v800 = vunpack.c.l.b16 %v570
    %v801 = vunpack.c.h.b16 %v570
    %v802 = vunpack.c.l.b16 %v571
    %v803 = vunpack.c.h.b16 %v571
    %v804 = vunpack.c.l.b16 %v572
    %v805 = vunpack.c.l.b16 %v573
    %v806 = vunpack.c.h.b16 %v573
    %v807 = vunpack.c.l.b16 %v574
    %v808 = vunpack.c.h.b16 %v574
    %v809 = vunpack.c.l.b16 %v575
    %v810 = vunpack.c.l.b16 %v576
    %v811 = vunpack.c.h.b16 %v576
    %v812 = vunpack.c.l.b16 %v577
    %v813 = vunpack.c.h.b16 %v577
    %v814 = vunpack.c.l.b16 %v578
    %v815 = vunpack.c.l.b16 %v579
    %v816 = vunpack.c.h.b16 %v579
    %v817 = vunpack.c.l.b16 %v580
    %v818 = vunpack.c.h.b16 %v580
    %v819 = vunpack.c.l.b16 %v581
    %v820 = vunpack.c.l.b16 %v582
    %v821 = vunpack.c.h.b16 %v582
    %v822 = vunpack.c.l.b16 %v583
    %v823 = vunpack.c.h.b16 %v583
    %v824 = vunpack.c.l.b16 %v584
    %v825 = vunpack.c.l.b16 %v585
    %v826 = vunpack.c.h.b16 %v585
    %v827 = vunpack.c.l.b16 %v586
    %v828 = vunpack.c.h.b16 %v586
    %v829 = vunpack.c.l.b16 %v587
    %v830 = vunpack.c.l.b16 %v588
    %v831 = vunpack.c.h.b16 %v588
    %v832 = vunpack.c.l.b16 %v589
    %v833 = vunpack.c.h.b16 %v589
    %v834 = vunpack.c.l.b16 %v590
    %v835 = vunpack.c.l.b16 %v591
    %v836 = vunpack.c.h.b16 %v591
    %v837 = vunpack.c.l.b16 %v592
    %v838 = vunpack.c.h.b16 %v592
    %v839 = vunpack.c.l.b16 %v593
    %v840 = vunpack.c.l.b16 %v594
    %v841 = vunpack.c.h.b16 %v594
    %v842 = vunpack.c.l.b16 %v595
    %v843 = vunpack.c.h.b16 %v595
    %v844 = vunpack.c.l.b16 %v596
    %v845 = vunpack.c.l.b16 %v597
    %v846 = vunpack.c.h.b16 %v597
    %v847 = vunpack.c.l.b16 %v598
    %v848 = vunpack.c.h.b16 %v598
    %v849 = vunpack.c.l.b16 %v599
    %v850 = vunpack.c.l.b16 %v600
    %v851 = vunpack.c.h.b16 %v600
    %v852 = vunpack.c.l.b16 %v601
    %v853 = vunpack.c.h.b16 %v601
    %v854 = vunpack.c.l.b16 %v602
    %v855 = vunpack.c.l.b16 %v603
    %v856 = vunpack.c.h.b16 %v603
    %v857 = vunpack.c.l.b16 %v604
    %v858 = vunpack.c.h.b16 %v604
    %v859 = vunpack.c.l.b16 %v605
    %v860 = vunpack.c.l.b16 %v606
    %v861 = vunpack.c.h.b16 %v606
    %v862 = vunpack.c.l.b16 %v607
    %v863 = vunpack.c.h.b16 %v607
    %v864 = vunpack.c.l.b16 %v608
    %v865 = vunpack.c.l.b16 %v609
    %v866 = vunpack.c.h.b16 %v609
    %v867 = vunpack.c.l.b16 %v610
    %v868 = vunpack.c.h.b16 %v610
    %v869 = vunpack.c.l.b16 %v611
    %v870 = vunpack.c.l.b16 %v612
    %v871 = vunpack.c.h.b16 %v612
    %v872 = vunpack.c.l.b16 %v613
    %v873 = vunpack.c.h.b16 %v613
    %v874 = vunpack.c.l.b16 %v614
    %v875 = vunpack.c.l.b16 %v615
    %v876 = vunpack.c.h.b16 %v615
    %v877 = vunpack.c.l.b16 %v616
    %v878 = vunpack.c.h.b16 %v616
    %v879 = vunpack.c.l.b16 %v617
    %v880 = vunpack.c.l.b16 %v618
    %v881 = vunpack.c.h.b16 %v618
    %v882 = vunpack.c.l.b16 %v619
    %v883 = vunpack.c.h.b16 %v619
    %v884 = vunpack.c.l.b16 %v620
    %v885 = vunpack.c.l.b16 %v621
    %v886 = vunpack.c.h.b16 %v621
    %v887 = vunpack.c.l.b16 %v622
    %v888 = vunpack.c.h.b16 %v622
    %v889 = vunpack.c.l.b16 %v623
    %v890 = vunpack.c.l.b16 %v624
    %v891 = vunpack.c.h.b16 %v624
    %v892 = vunpack.c.l.b16 %v625
    %v893 = vunpack.c.h.b16 %v625
    %v894 = vunpack.c.l.b16 %v626
    %v895 = vpack.c.b16 %v740, %v735
    %v896 = vpack.c.b16 %v741, %v736
    %v897 = vpack.c.b16 %v742, %v737
    %v898 = vpack.c.b16 %v743, %v738
    %v899 = vpack.c.b16 %v744, %v739
    %v900 = vpack.c.b16 %v750, %v745
    %v901 = vpack.c.b16 %v751, %v746
    %v902 = vpack.c.b16 %v752, %v747
    %v903 = vpack.c.b16 %v753, %v748
    %v904 = vpack.c.b16 %v754, %v749
    %v905 = vpack.c.b16 %v760, %v755
    %v906 = vpack.c.b16 %v761, %v756
    %v907 = vpack.c.b16 %v762, %v757
    %v908 = vpack.c.b16 %v763, %v758
    %v909 = vpack.c.b16 %v764, %v759
    %v910 = vpack.c.b16 %v770, %v765
    %v911 = vpack.c.b16 %v771, %v766
    %v912 = vpack.c.b16 %v772, %v767
    %v913 = vpack.c.b16 %v773, %v768
    %v914 = vpack.c.b16 %v774, %v769
    %v915 = vpack.c.b16 %v780, %v775
    %v916 = vpack.c.b16 %v781, %v776
    %v917 = vpack.c.b16 %v782, %v777
    %v918 = vpack.c.b16 %v783, %v778
    %v919 = vpack.c.b16 %v784, %v779
    %v920 = vpack.c.b16 %v790, %v785
    %v921 = vpack.c.b16 %v791, %v786
    %v922 = vpack.c.b16 %v792, %v787
    %v923 = vpack.c.b16 %v793, %v788
    %v924 = vpack.c.b16 %v794, %v789
    %v925 = vpack.c.b16 %v800, %v795
    %v926 = vpack.c.b16 %v801, %v796
    %v927 = vpack.c.b16 %v802, %v797
    %v928 = vpack.c.b16 %v803, %v798
    %v929 = vpack.c.b16 %v804, %v799
    %v930 = vpack.c.b16 %v810, %v805
    %v931 = vpack.c.b16 %v811, %v806
    %v932 = vpack.c.b16 %v812, %v807
    %v933 = vpack.c.b16 %v813, %v808
    %v934 = vpack.c.b16 %v814, %v809
    %v935 = vpack.c.b16 %v820, %v815
    %v936 = vpack.c.b16 %v821, %v816
    %v937 = vpack.c.b16 %v822, %v817
    %v938 = vpack.c.b16 %v823, %v818
    %v939 = vpack.c.b16 %v824, %v819
    %v940 = vpack.c.b16 %v830, %v825
    %v941 = vpack.c.b16 %v831, %v826
    %v942 = vpack.c.b16 %v832, %v827
    %v943 = vpack.c.b16 %v833, %v828
    %v944 = vpack.c.b16 %v834, %v829
    %v945 = vpack.c.b16 %v840, %v835
    %v946 = vpack.c.b16 %v841, %v836
    %v947 = vpack.c.b16 %v842, %v837
    %v948 = vpack.c.b16 %v843, %v838
    %v949 = vpack.c.b16 %v844, %v839
    %v950 = vpack.c.b16 %v850, %v845
    %v951 = vpack.c.b16 %v851, %v846
    %v952 = vpack.c.b16 %v852, %v847
    %v953 = vpack.c.b16 %v853, %v848
    %v954 = vpack.c.b16 %v854, %v849
    %v955 = vpack.c.b16 %v860, %v855
    %v956 = vpack.c.b16 %v861, %v856
    %v957 = vpack.c.b16 %v862, %v857
    %v958 = vpack.c.b16 %v863, %v858
    %v959 = vpack.c.b16 %v864, %v859
    %v960 = vpack.c.b16 %v870, %v865
    %v961 = vpack.c.b16 %v871, %v866
    %v962 = vpack.c.b16 %v872, %v867
    %v963 = vpack.c.b16 %v873, %v868
    %v964 = vpack.c.b16 %v874, %v869
    %v965 = vpack.c.b16 %v880, %v875
    %v966 = vpack.c.b16 %v881, %v876
    %v967 = vpack.c.b16 %v882, %v877
    %v968 = vpack.c.b16 %v883, %v878
    %v969 = vpack.c.b16 %v884, %v879
    %v970 = vpack.c.b16 %v890, %v885
    %v971 = vpack.c.b16 %v891, %v886
    %v972 = vpack.c.b16 %v892, %v887
    %v973 = vpack.c.b16 %v893, %v888
    %v974 = vpack.c.b16 %v894, %v889
    %1055 = vmatpush.bf16.msra.mxu0 %v930
    %1056 = vmatpush.bf16.msra.mxu0 %v925
    %1057 = vmatpush.bf16.msra.mxu0 %v920
    %1058 = vmatpush.bf16.msra.mxu0 %v915
    %1059 = vmatpush.bf16.msra.mxu0 %v910
    %1060 = vmatpush.bf16.msra.mxu0 %v905
    %1061 = vmatpush.bf16.msra.mxu0 %v900
    %1062 = vmatpush.bf16.msra.mxu0 %v895
    %1063 = vmatmul.bf16.gmra.mxu0 %v529
    %v1064 = vpop.f32.mrf.mxu0
    %v1065 = vadd.f32 %v629, %v1064
    %v1066 = vpop.f32.mrf.mxu0
    %1067 = vdwg.mxu0
    %1068 = vmatpush.bf16.msra.mxu0 %v970
    %1069 = vmatpush.bf16.msra.mxu0 %v965
    %1070 = vmatpush.bf16.msra.mxu0 %v960
    %1071 = vmatpush.bf16.msra.mxu0 %v955
    %1072 = vmatpush.bf16.msra.mxu0 %v950
    %1073 = vmatpush.bf16.msra.mxu0 %v945
    %1074 = vmatpush.bf16.msra.mxu0 %v940
    %1075 = vmatpush.bf16.msra.mxu0 %v935
    %1076 = vmatmul.bf16.gmra.mxu0 %v530
    %v1077 = vpop.f32.mrf.mxu0
    %v1078 = vadd.f32 %v1065, %v1077
    %v1079 = vpop.f32.mrf.mxu0
    %1080 = vdwg.mxu0
    %1081 = vmatpush.bf16.msra.mxu0 %v931
    %1082 = vmatpush.bf16.msra.mxu0 %v926
    %1083 = vmatpush.bf16.msra.mxu0 %v921
    %1084 = vmatpush.bf16.msra.mxu0 %v916
    %1085 = vmatpush.bf16.msra.mxu0 %v911
    %1086 = vmatpush.bf16.msra.mxu0 %v906
    %1087 = vmatpush.bf16.msra.mxu0 %v901
    %1088 = vmatpush.bf16.msra.mxu0 %v896
    %1089 = vmatmul.bf16.gmra.mxu0 %v529
    %v1090 = vpop.f32.mrf.mxu0
    %v1091 = vadd.f32 %v630, %v1090
    %v1092 = vpop.f32.mrf.mxu0
    %1093 = vdwg.mxu0
    %1094 = vmatpush.bf16.msra.mxu0 %v971
    %1095 = vmatpush.bf16.msra.mxu0 %v966
    %1096 = vmatpush.bf16.msra.mxu0 %v961
    %1097 = vmatpush.bf16.msra.mxu0 %v956
    %1098 = vmatpush.bf16.msra.mxu0 %v951
    %1099 = vmatpush.bf16.msra.mxu0 %v946
    %1100 = vmatpush.bf16.msra.mxu0 %v941
    %1101 = vmatpush.bf16.msra.mxu0 %v936
    %1102 = vmatmul.bf16.gmra.mxu0 %v530
    %v1103 = vpop.f32.mrf.mxu0
    %v1104 = vadd.f32 %v1091, %v1103
    %v1105 = vpop.f32.mrf.mxu0
    %1106 = vdwg.mxu0
    %1107 = vmatpush.bf16.msra.mxu0 %v932
    %1108 = vmatpush.bf16.msra.mxu0 %v927
    %1109 = vmatpush.bf16.msra.mxu0 %v922
    %1110 = vmatpush.bf16.msra.mxu0 %v917
    %1111 = vmatpush.bf16.msra.mxu0 %v912
    %1112 = vmatpush.bf16.msra.mxu0 %v907
    %1113 = vmatpush.bf16.msra.mxu0 %v902
    %1114 = vmatpush.bf16.msra.mxu0 %v897
    %1115 = vmatmul.bf16.gmra.mxu0 %v529
    %v1116 = vpop.f32.mrf.mxu0
    %v1117 = vadd.f32 %v631, %v1116
    %v1118 = vpop.f32.mrf.mxu0
    %1119 = vdwg.mxu0
    %1120 = vmatpush.bf16.msra.mxu0 %v972
    %1121 = vmatpush.bf16.msra.mxu0 %v967
    %1122 = vmatpush.bf16.msra.mxu0 %v962
    %1123 = vmatpush.bf16.msra.mxu0 %v957
    %1124 = vmatpush.bf16.msra.mxu0 %v952
    %1125 = vmatpush.bf16.msra.mxu0 %v947
    %1126 = vmatpush.bf16.msra.mxu0 %v942
    %1127 = vmatpush.bf16.msra.mxu0 %v937
    %1128 = vmatmul.bf16.gmra.mxu0 %v530
    %v1129 = vpop.f32.mrf.mxu0
    %v1130 = vadd.f32 %v1117, %v1129
    %v1131 = vpop.f32.mrf.mxu0
    %1132 = vdwg.mxu0
    %1133 = vmatpush.bf16.msra.mxu0 %v933
    %1134 = vmatpush.bf16.msra.mxu0 %v928
    %1135 = vmatpush.bf16.msra.mxu0 %v923
    %1136 = vmatpush.bf16.msra.mxu0 %v918
    %1137 = vmatpush.bf16.msra.mxu0 %v913
    %1138 = vmatpush.bf16.msra.mxu0 %v908
    %1139 = vmatpush.bf16.msra.mxu0 %v903
    %1140 = vmatpush.bf16.msra.mxu0 %v898
    %1141 = vmatmul.bf16.gmra.mxu0 %v529
    %v1142 = vpop.f32.mrf.mxu0
    %v1143 = vadd.f32 %v632, %v1142
    %v1144 = vpop.f32.mrf.mxu0
    %1145 = vdwg.mxu0
    %1146 = vmatpush.bf16.msra.mxu0 %v973
    %1147 = vmatpush.bf16.msra.mxu0 %v968
    %1148 = vmatpush.bf16.msra.mxu0 %v963
    %1149 = vmatpush.bf16.msra.mxu0 %v958
    %1150 = vmatpush.bf16.msra.mxu0 %v953
    %1151 = vmatpush.bf16.msra.mxu0 %v948
    %1152 = vmatpush.bf16.msra.mxu0 %v943
    %1153 = vmatpush.bf16.msra.mxu0 %v938
    %1154 = vmatmul.bf16.gmra.mxu0 %v530
    %v1155 = vpop.f32.mrf.mxu0
    %v1156 = vadd.f32 %v1143, %v1155
    %v1157 = vpop.f32.mrf.mxu0
    %1158 = vdwg.mxu0
    %1159 = vmatpush.bf16.msra.mxu0 %v934
    %1160 = vmatpush.bf16.msra.mxu0 %v929
    %1161 = vmatpush.bf16.msra.mxu0 %v924
    %1162 = vmatpush.bf16.msra.mxu0 %v919
    %1163 = vmatpush.bf16.msra.mxu0 %v914
    %1164 = vmatpush.bf16.msra.mxu0 %v909
    %1165 = vmatpush.bf16.msra.mxu0 %v904
    %1166 = vmatpush.bf16.msra.mxu0 %v899
    %1167 = vmatmul.bf16.gmra.mxu0 %v529
    %v1168 = vpop.f32.mrf.mxu0
    %v1169 = vadd.f32 %v633, %v1168
    %v1170 = vpop.f32.mrf.mxu0
    %1171 = vdwg.mxu0
    %1172 = vmatpush.bf16.msra.mxu0 %v974
    %1173 = vmatpush.bf16.msra.mxu0 %v969
    %1174 = vmatpush.bf16.msra.mxu0 %v964
    %1175 = vmatpush.bf16.msra.mxu0 %v959
    %1176 = vmatpush.bf16.msra.mxu0 %v954
    %1177 = vmatpush.bf16.msra.mxu0 %v949
    %1178 = vmatpush.bf16.msra.mxu0 %v944
    %1179 = vmatpush.bf16.msra.mxu0 %v939
    %1180 = vmatmul.bf16.gmra.mxu0 %v530
    %v1181 = vpop.f32.mrf.mxu0
    %v1182 = vadd.f32 %v1169, %v1181
    %v1183 = vpop.f32.mrf.mxu0
    %1184 = vdwg.mxu0
    %v1185 = vadd.f32 %v1078, %v1104
    %v1186 = vadd.f32 %v1185, %v1130
    %v1187 = vadd.f32 %v1186, %v1156
    %v1188 = vmul.f32 %v1187, 0.25
    %v1189 = vsub.f32 %v1182, %v1188
    %v1190 = vadd.f32 %v1189, %v1078
    %vm1191 = vcmask 1041408
    %v1192 = vsel %vm1191, %v1190, -inf
    %1193 = vmax.xlane.f32.xlu0 %v1192
    %v1194 = vpop.xlane.xlu0 %1193
    %v1195 = vsub.f32 %v1190, %v1194
    %v1196 = vmul.f32 %v1195, 1.442695
    %v1197 = vpow.pop %v1196
    %v1198 = vsel %vm1191, %v1197, 0.0
    %1199 = vadd.xlane.f32.xlu0 %v1198
    %v1200 = vpop.xlane.xlu0 %1199
    %v1201 = vrcp.pop %v1200
    %v1202 = vmul.f32 %v1197, %v1201
    %v1203 = vmax.f32 %v1202, 0.001
    %v1204 = vpack.c.bf16 %v1203, %v1203
    %1205 = vst [vmem:[%s9] sm:$0x1] %v1204
    %v1206 = vadd.f32 %v1189, %v1104
    %v1207 = vsel %vm1191, %v1206, -inf
    %1208 = vmax.xlane.f32.xlu0 %v1207
    %v1209 = vpop.xlane.xlu0 %1208
    %v1210 = vsub.f32 %v1206, %v1209
    %v1211 = vmul.f32 %v1210, 1.442695
    %v1212 = vpow.pop %v1211
    %v1213 = vsel %vm1191, %v1212, 0.0
    %1214 = vadd.xlane.f32.xlu0 %v1213
    %v1215 = vpop.xlane.xlu0 %1214
    %v1216 = vrcp.pop %v1215
    %v1217 = vmul.f32 %v1212, %v1216
    %v1218 = vmax.f32 %v1217, 0.001
    %v1219 = vpack.c.bf16 %v1218, %v1218
    %1220 = vst [vmem:[%s9 + $0x1] sm:$0x1] %v1219
    %v1221 = vadd.f32 %v1189, %v1130
    %v1222 = vsel %vm1191, %v1221, -inf
    %1223 = vmax.xlane.f32.xlu0 %v1222
    %v1224 = vpop.xlane.xlu0 %1223
    %v1225 = vsub.f32 %v1221, %v1224
    %v1226 = vmul.f32 %v1225, 1.442695
    %v1227 = vpow.pop %v1226
    %v1228 = vsel %vm1191, %v1227, 0.0
    %1229 = vadd.xlane.f32.xlu0 %v1228
    %v1230 = vpop.xlane.xlu0 %1229
    %v1231 = vrcp.pop %v1230
    %v1232 = vmul.f32 %v1227, %v1231
    %v1233 = vmax.f32 %v1232, 0.001
    %v1234 = vpack.c.bf16 %v1233, %v1233
    %1235 = vst [vmem:[%s9 + $0x2] sm:$0x1] %v1234
    %v1236 = vadd.f32 %v1189, %v1156
    %v1237 = vsel %vm1191, %v1236, -inf
    %1238 = vmax.xlane.f32.xlu0 %v1237
    %v1239 = vpop.xlane.xlu0 %1238
    %v1240 = vsub.f32 %v1236, %v1239
    %v1241 = vmul.f32 %v1240, 1.442695
    %v1242 = vpow.pop %v1241
    %v1243 = vsel %vm1191, %v1242, 0.0
    %1244 = vadd.xlane.f32.xlu0 %v1243
    %v1245 = vpop.xlane.xlu0 %1244
    %v1246 = vrcp.pop %v1245
    %v1247 = vmul.f32 %v1242, %v1246
    %v1248 = vmax.f32 %v1247, 0.001
    %v1249 = vpack.c.bf16 %v1248, %v1248
    %1250 = vst [vmem:[%s9 + $0x3] sm:$0x1] %v1249
    // Predicated region
    $region58: #{rainbow_forward.1} parent=1 // pred_check
      _
    $region59: #{rainbow_forward.1} parent=1 // pred_check_branch
      %1252 = sbr.rel (0) target = $region61
    $region60: #{rainbow_forward.1} parent=1 // pred_region
      _
    $region61: #{rainbow_forward.1} parent=1 // pred_fallthru
      _
    // Predicated region
    $region62: #{rainbow_forward.1} parent=1 // pred_check
      _
    $region63: #{rainbow_forward.1} parent=1 // pred_check_branch
      %1254 = sbr.rel (0) target = $region65
    $region64: #{rainbow_forward.1} parent=1 // pred_region
      _
    $region65: #{rainbow_forward.1} parent=1 // pred_fallthru
      _
    %1255 = vsyncpa [#allocation3], 1
    %1256 = vsyncpa [#allocation5], 1
    %1257 = vsyncpa [#allocation8], 1

</llo_original>
